<compile_context>
chip_gen: v7x
topology: tpu7x:2x2x1
jax: 0.10.0
libtpu: 0.0.40
codegen_flags: <defaults>
</compile_context>

<pallas_src>
import functools

import jax
import jax.numpy as jnp
from jax.experimental import pallas as pl
from jax.experimental.pallas import tpu as pltpu

LANES = 128


def _pad8(r):
    return ((r + 7) // 8) * 8


def _param_layout(H):
    """8-row-aligned offsets of each parameter inside the packed (rows, 128) slab."""
    o_w1 = 0
    o_b1 = o_w1 + _pad8(1)
    o_w2 = o_b1 + _pad8(1)
    o_b2 = o_w2 + _pad8(H)
    o_wc = o_b2 + _pad8(1)
    o_bc = o_wc + _pad8(H)
    total = o_bc + _pad8(1)
    return o_w1, o_b1, o_w2, o_b2, o_wc, o_bc, total


def pack_params(W1, b1, W2, b2, WcT, bc):
    """Pack all weights/biases into one (rows, 128) f32 slab.

    Called ONCE at model init; the per-forward path contains no packing or
    HBM round-trips, only the pallas_call.
    """
    H = W1.shape[1]
    C = WcT.shape[1]
    assert H <= LANES and C <= LANES
    o_w1, o_b1, o_w2, o_b2, o_wc, o_bc, total = _param_layout(H)
    slab = jnp.zeros((total, LANES), jnp.float32)
    slab = slab.at[o_w1:o_w1 + 1, :H].set(W1.astype(jnp.float32))
    slab = slab.at[o_b1:o_b1 + 1, :H].set(b1.astype(jnp.float32))
    slab = slab.at[o_w2:o_w2 + H, :H].set(W2.astype(jnp.float32))
    slab = slab.at[o_b2:o_b2 + 1, :H].set(b2.astype(jnp.float32))
    slab = slab.at[o_wc:o_wc + H, :C].set(WcT.astype(jnp.float32))
    slab = slab.at[o_bc:o_bc + 1, :C].set(bc.astype(jnp.float32))
    return slab


def classifier_kernel(a_ref, p_ref, color_ref, params_ref, out_ref, *, H):
    """One graph-batch per grid step.

    a_ref      (N, N)     bf16  normalized adjacency
    p_ref      (GP, N)    bf16  mean-pooling matrix (padded rows are zero)
    color_ref  (N, 1)     f32   node scalar feature
    params_ref (rows,128) f32   packed W1/b1/W2/b2/WcT/bc
    out_ref    (GP, 128)  f32   lane-dense padded logits
    """
    o_w1, o_b1, o_w2, o_b2, o_wc, o_bc, _ = _param_layout(H)

    # Static ref slices: only the rows/lanes actually used are loaded.
    W1 = params_ref[o_w1:o_w1 + 1, :H]                           # (1, H) f32
    b1 = params_ref[o_b1:o_b1 + 1, :H]                           # (1, H) f32
    W2 = params_ref[o_w2:o_w2 + H, :H].astype(jnp.bfloat16)      # (H, H)
    b2 = params_ref[o_b2:o_b2 + 1, :H]                           # (1, H) f32
    Wc = params_ref[o_wc:o_wc + H, :].astype(jnp.bfloat16)       # (H, 128)
    bc = params_ref[o_bc:o_bc + 1, :]                            # (1, 128) f32

    a = a_ref[...]                                               # (N, N) bf16
    color = color_ref[...]                                       # (N, 1) f32

    # ---- GraphConv1 (in_dim == 1): relu(A @ (color * W1) + b1) ------------
    # h0 @ W1 is the outer product color * W1 (VPU); aggregation rides the MXU.
    outer = (color * W1).astype(jnp.bfloat16)                    # (N, H)
    h1 = jnp.maximum(
        jnp.dot(a, outer, preferred_element_type=jnp.float32) + b1, 0.0)

    # ---- GraphConv2: relu(A @ h1 @ W2 + b2) --------------------------------
    ah1 = jnp.dot(a, h1.astype(jnp.bfloat16),
                  preferred_element_type=jnp.float32)            # (N, H)
    h2 = jnp.maximum(
        jnp.dot(ah1.astype(jnp.bfloat16), W2,
                preferred_element_type=jnp.float32) + b2, 0.0)

    # ---- dgl.mean_nodes + Linear classify (lane-dense padded store) -------
    hg = jnp.dot(p_ref[...], h2.astype(jnp.bfloat16),
                 preferred_element_type=jnp.float32)             # (GP, H)
    out_ref[...] = jnp.dot(hg.astype(jnp.bfloat16), Wc,
                           preferred_element_type=jnp.float32) + bc


def classifier_forward(A, P, color, param_slab, *, hidden_dim, n_graphs,
                       n_classes):
    """A: (B, N, N) bf16; P: (B, GP, N) bf16; color: (B, N, 1) f32."""
    B, N, _ = A.shape
    GP = P.shape[1]
    rows = param_slab.shape[0]

    out_padded = pl.pallas_call(
        functools.partial(classifier_kernel, H=hidden_dim),
        out_shape=jax.ShapeDtypeStruct((B, GP, LANES), jnp.float32),
        grid=(B,),
        in_specs=[
            pl.BlockSpec((None, N, N), lambda b: (b, 0, 0)),
            pl.BlockSpec((None, GP, N), lambda b: (b, 0, 0)),
            pl.BlockSpec((None, N, 1), lambda b: (b, 0, 0)),
            pl.BlockSpec((rows, LANES), lambda b: (0, 0)),  # revisited: 1 DMA
        ],
        out_specs=pl.BlockSpec((None, GP, LANES), lambda b: (b, 0, 0)),
        compiler_params=pltpu.CompilerParams(
            dimension_semantics=("parallel",)),             # megacore on v7x
    )(A, P, color, param_slab)
    return out_padded[:, :n_graphs, :n_classes]


def reference_forward(A, P, color, W1, b1, W2, b2, WcT, bc):
    """Pure-JAX f32 reference, per graph-batch."""
    def single(a, p, c):
        h1 = jnp.maximum(a @ (c @ W1) + b1, 0.0)
        h2 = jnp.maximum(a @ h1 @ W2 + b2, 0.0)
        hg = p @ h2
        return hg @ WcT + bc
    return jnp.stack([single(A[i], P[i], color[i]) for i in range(A.shape[0])])


if __name__ == "__main__":
    # ---- sizes (small, consistent with the module) -------------------------
    in_dim, hidden_dim, n_classes = 1, 32, 4
    n_graph_batches = 2                  # B independent batched-graph forwards
    n_graphs, nodes_per_graph = 2, 8     # graphs per batched graph
    N = n_graphs * nodes_per_graph       # 16 nodes per batched graph
    GP = _pad8(n_graphs)                 # padded pooled-row count -> 8

    key = jax.random.PRNGKey(0)
    k_adj, k_color, k_w1, k_w2, k_wc = jax.random.split(key, 5)

    # ---- synthetic batched graphs (block-diagonal adjacencies) -------------
    A_list, P_list, color_list = [], [], []
    for bidx in range(n_graph_batches):
        adj = jnp.zeros((N, N), jnp.float32)
        for g in range(n_graphs):
            sub = jax.random.bernoulli(
                jax.random.fold_in(k_adj, bidx * n_graphs + g),
                p=0.4, shape=(nodes_per_graph, nodes_per_graph)).astype(jnp.float32)
            sub = jnp.maximum(sub, sub.T)                  # symmetrize
            sub = sub * (1.0 - jnp.eye(nodes_per_graph))   # no self-loops
            s = g * nodes_per_graph
            adj = adj.at[s:s + nodes_per_graph, s:s + nodes_per_graph].set(sub)
        deg = jnp.clip(adj.sum(axis=1), 1.0, None)
        dis = 1.0 / jnp.sqrt(deg)
        A_list.append(dis[:, None] * adj * dis[None, :])

        Pm = jnp.zeros((GP, N), jnp.float32)
        for g in range(n_graphs):
            s = g * nodes_per_graph
            Pm = Pm.at[g, s:s + nodes_per_graph].set(1.0 / nodes_per_graph)
        P_list.append(Pm)

        col = jax.random.randint(jax.random.fold_in(k_color, bidx),
                                 (N,), 0, 6).astype(jnp.float32)
        color_list.append(col.reshape(N, 1))

    A_bf16 = jnp.stack(A_list).astype(jnp.bfloat16)        # (B, N, N)
    P_bf16 = jnp.stack(P_list).astype(jnp.bfloat16)        # (B, GP, N)
    color = jnp.stack(color_list)                          # (B, N, 1) f32

    # ---- deterministic parameters (GraphConv / Linear shapes) --------------
    W1 = (jax.random.normal(k_w1, (in_dim, hidden_dim)) * 0.1).astype(jnp.float32)
    b1 = jnp.zeros((1, hidden_dim), jnp.float32)
    W2 = (jax.random.normal(k_w2, (hidden_dim, hidden_dim)) * 0.1).astype(jnp.float32)
    b2 = jnp.full((1, hidden_dim), 0.01, jnp.float32)
    Wc = (jax.random.normal(k_wc, (n_classes, hidden_dim)) * 0.1).astype(jnp.float32)
    WcT = Wc.T                                              # (H, C)
    bc = jnp.full((1, n_classes), 0.02, jnp.float32)

    param_slab = pack_params(W1, b1, W2, b2, WcT, bc)       # packed once at init

    # ---- run kernel ---------------------------------------------------------
    out = classifier_forward(A_bf16, P_bf16, color, param_slab,
                             hidden_dim=hidden_dim,
                             n_graphs=n_graphs, n_classes=n_classes)
    out = jax.block_until_ready(out)

    ref = reference_forward(A_bf16.astype(jnp.float32),
                            jnp.stack(P_list)[:, :n_graphs, :],
                            color, W1, b1, W2, b2, WcT, bc)

    assert out.shape == (n_graph_batches, n_graphs, n_classes)
    # bf16 MXU operands (f32 accumulation) -> loosened tolerance vs f32 ref.
    assert jnp.allclose(out, ref, rtol=2e-2, atol=2e-2)

    print("KERNEL_OK")
</pallas_src>

<mosaic_0001>
module attributes {stable_mosaic.version = 11 : i64} {
  func.func @classifier_kernel(%arg0: i32, %arg1: memref<1x16x16xbf16, #tpu.memory_space<vmem>>, %arg2: memref<1x8x16xbf16, #tpu.memory_space<vmem>>, %arg3: memref<1x16x1xf32, #tpu.memory_space<vmem>>, %arg4: memref<96x128xf32, #tpu.memory_space<vmem>>, %arg5: memref<1x8x128xf32, #tpu.memory_space<vmem>>) attributes {dimension_semantics = [#tpu.dimension_semantics<parallel>], iteration_bounds = array<i64: 2>, scalar_prefetch = 0 : i64, scratch_operands = 0 : i64, tpu.core_type = #tpu.core_type<tc>, window_params = [{transform_indices = @transform_0, window_bounds = array<i64: 1, 16, 16>}, {transform_indices = @transform_1, window_bounds = array<i64: 1, 8, 16>}, {transform_indices = @transform_2, window_bounds = array<i64: 1, 16, 1>}, {pipeline_mode = #tpu.pipeline_mode<synchronous>, transform_indices = @transform_3, window_bounds = array<i64: 96, 128>}, {transform_indices = @transform_4, window_bounds = array<i64: 1, 8, 128>}]} {
    %c0 = arith.constant 0 : index
    %c0_0 = arith.constant 0 : index
    %0 = vector.load %arg4[%c0, %c0_0] : memref<96x128xf32, #tpu.memory_space<vmem>>, vector<1x32xf32>
    %c8 = arith.constant 8 : index
    %c0_1 = arith.constant 0 : index
    %1 = vector.load %arg4[%c8, %c0_1] : memref<96x128xf32, #tpu.memory_space<vmem>>, vector<1x32xf32>
    %c16 = arith.constant 16 : index
    %c0_2 = arith.constant 0 : index
    %2 = vector.load %arg4[%c16, %c0_2] : memref<96x128xf32, #tpu.memory_space<vmem>>, vector<32x32xf32>
    %3 = arith.truncf %2 : vector<32x32xf32> to vector<32x32xbf16>
    %c48 = arith.constant 48 : index
    %c0_3 = arith.constant 0 : index
    %4 = vector.load %arg4[%c48, %c0_3] : memref<96x128xf32, #tpu.memory_space<vmem>>, vector<1x32xf32>
    %c56 = arith.constant 56 : index
    %c0_4 = arith.constant 0 : index
    %5 = vector.load %arg4[%c56, %c0_4] : memref<96x128xf32, #tpu.memory_space<vmem>>, vector<32x128xf32>
    %6 = arith.truncf %5 : vector<32x128xf32> to vector<32x128xbf16>
    %c88 = arith.constant 88 : index
    %c0_5 = arith.constant 0 : index
    %7 = vector.load %arg4[%c88, %c0_5] : memref<96x128xf32, #tpu.memory_space<vmem>>, vector<1x128xf32>
    %c0_6 = arith.constant 0 : index
    %c0_7 = arith.constant 0 : index
    %c0_8 = arith.constant 0 : index
    %8 = vector.load %arg1[%c0_6, %c0_7, %c0_8] : memref<1x16x16xbf16, #tpu.memory_space<vmem>>, vector<1x16x16xbf16>
    %9 = vector.shape_cast %8 : vector<1x16x16xbf16> to vector<16x16xbf16>
    %c0_9 = arith.constant 0 : index
    %c0_10 = arith.constant 0 : index
    %c0_11 = arith.constant 0 : index
    %10 = vector.load %arg3[%c0_9, %c0_10, %c0_11] : memref<1x16x1xf32, #tpu.memory_space<vmem>>, vector<1x16x1xf32>
    %11 = vector.shape_cast %10 : vector<1x16x1xf32> to vector<16x1xf32>
    %12 = vector.broadcast %11 : vector<16x1xf32> to vector<16x32xf32>
    %13 = vector.broadcast %0 : vector<1x32xf32> to vector<16x32xf32>
    %14 = arith.mulf %12, %13 : vector<16x32xf32>
    %15 = arith.truncf %14 : vector<16x32xf32> to vector<16x32xbf16>
    %cst = arith.constant dense<0.000000e+00> : vector<16x32xf32>
    %16 = tpu.matmul %9, %15, %cst {dimension_numbers = #tpu.dot_dimension_numbers<[1], [0], [0], [1], [0, 0, 1, 1], [], []>} : vector<16x16xbf16>, vector<16x32xbf16>, vector<16x32xf32> -> vector<16x32xf32>
    %17 = vector.broadcast %1 : vector<1x32xf32> to vector<16x32xf32>
    %18 = arith.addf %16, %17 : vector<16x32xf32>
    %cst_12 = arith.constant 0.000000e+00 : f32
    %19 = vector.broadcast %cst_12 : f32 to vector<16x32xf32>
    %20 = arith.maximumf %18, %19 : vector<16x32xf32>
    %21 = arith.truncf %20 : vector<16x32xf32> to vector<16x32xbf16>
    %cst_13 = arith.constant dense<0.000000e+00> : vector<16x32xf32>
    %22 = tpu.matmul %9, %21, %cst_13 {dimension_numbers = #tpu.dot_dimension_numbers<[1], [0], [0], [1], [0, 0, 1, 1], [], []>} : vector<16x16xbf16>, vector<16x32xbf16>, vector<16x32xf32> -> vector<16x32xf32>
    %23 = arith.truncf %22 : vector<16x32xf32> to vector<16x32xbf16>
    %cst_14 = arith.constant dense<0.000000e+00> : vector<16x32xf32>
    %24 = tpu.matmul %23, %3, %cst_14 {dimension_numbers = #tpu.dot_dimension_numbers<[1], [0], [0], [1], [0, 0, 1, 1], [], []>} : vector<16x32xbf16>, vector<32x32xbf16>, vector<16x32xf32> -> vector<16x32xf32>
    %25 = vector.broadcast %4 : vector<1x32xf32> to vector<16x32xf32>
    %26 = arith.addf %24, %25 : vector<16x32xf32>
    %cst_15 = arith.constant 0.000000e+00 : f32
    %27 = vector.broadcast %cst_15 : f32 to vector<16x32xf32>
    %28 = arith.maximumf %26, %27 : vector<16x32xf32>
    %c0_16 = arith.constant 0 : index
    %c0_17 = arith.constant 0 : index
    %c0_18 = arith.constant 0 : index
    %29 = vector.load %arg2[%c0_16, %c0_17, %c0_18] : memref<1x8x16xbf16, #tpu.memory_space<vmem>>, vector<1x8x16xbf16>
    %30 = vector.shape_cast %29 : vector<1x8x16xbf16> to vector<8x16xbf16>
    %31 = arith.truncf %28 : vector<16x32xf32> to vector<16x32xbf16>
    %cst_19 = arith.constant dense<0.000000e+00> : vector<8x32xf32>
    %32 = tpu.matmul %30, %31, %cst_19 {dimension_numbers = #tpu.dot_dimension_numbers<[1], [0], [0], [1], [0, 0, 1, 1], [], []>} : vector<8x16xbf16>, vector<16x32xbf16>, vector<8x32xf32> -> vector<8x32xf32>
    %33 = arith.truncf %32 : vector<8x32xf32> to vector<8x32xbf16>
    %cst_20 = arith.constant dense<0.000000e+00> : vector<8x128xf32>
    %34 = tpu.matmul %33, %6, %cst_20 {dimension_numbers = #tpu.dot_dimension_numbers<[1], [0], [0], [1], [0, 0, 1, 1], [], []>} : vector<8x32xbf16>, vector<32x128xbf16>, vector<8x128xf32> -> vector<8x128xf32>
    %35 = vector.broadcast %7 : vector<1x128xf32> to vector<8x128xf32>
    %36 = arith.addf %34, %35 : vector<8x128xf32>
    %c0_21 = arith.constant 0 : index
    %c0_22 = arith.constant 0 : index
    %c0_23 = arith.constant 0 : index
    %37 = vector.load %arg5[%c0_21, %c0_22, %c0_23] : memref<1x8x128xf32, #tpu.memory_space<vmem>>, vector<1x8x128xf32>
    %38 = vector.shape_cast %37 : vector<1x8x128xf32> to vector<8x128xf32>
    %39 = vector.shape_cast %36 : vector<8x128xf32> to vector<1x8x128xf32>
    tpu.vector_store %arg5[%c0_21, %c0_22, %c0_23], %39 {strides = array<i32>} : memref<1x8x128xf32, #tpu.memory_space<vmem>>, vector<1x8x128xf32>,
    return
  }
  func.func @transform_0(%arg0: i32) -> (i32, i32, i32) {
    %c0_i32 = arith.constant 0 : i32
    %c0_i32_0 = arith.constant 0 : i32
    %c0_i32_1 = arith.constant 0 : i32
    return %arg0, %c0_i32, %c0_i32_0 : i32, i32, i32
  }
  func.func @transform_1(%arg0: i32) -> (i32, i32, i32) {
    %c0_i32 = arith.constant 0 : i32
    %c0_i32_0 = arith.constant 0 : i32
    %c0_i32_1 = arith.constant 0 : i32
    return %arg0, %c0_i32, %c0_i32_0 : i32, i32, i32
  }
  func.func @transform_2(%arg0: i32) -> (i32, i32, i32) {
    %c0_i32 = arith.constant 0 : i32
    %c0_i32_0 = arith.constant 0 : i32
    %c0_i32_1 = arith.constant 0 : i32
    return %arg0, %c0_i32, %c0_i32_0 : i32, i32, i32
  }
  func.func @transform_3(%arg0: i32) -> (i32, i32) {
    %c0_i32 = arith.constant 0 : i32
    %c0_i32_0 = arith.constant 0 : i32
    %c0_i32_1 = arith.constant 0 : i32
    return %c0_i32, %c0_i32_0 : i32, i32
  }
  func.func @transform_4(%arg0: i32) -> (i32, i32, i32) {
    %c0_i32 = arith.constant 0 : i32
    %c0_i32_0 = arith.constant 0 : i32
    %c0_i32_1 = arith.constant 0 : i32
    return %arg0, %c0_i32, %c0_i32_0 : i32, i32, i32
  }
}

</mosaic_0001>

<llo_original>
// kernel: tpu_custom_call.1
$region0: #{tpu_custom_call.1}
  #allocation0 [shape = 'u32[]', space=smem, size = 0x4, offset = 0x4, fixed_abs, tag = 'smem constant byte address 0x4 - core index']
  #allocation1 [shape = 'u32[144,128]{1,0:T(1,128)}', space=vmem, size = 0x12000, scoped, tag = 'internal scratch']
  %s0 = inlined_call_operand.vmem [shape: bf16[2,16,16], index: 0, kind: input, shape index: {}]
  %s1 = inlined_call_operand.vmem [shape: bf16[2,8,16], index: 1, kind: input, shape index: {}]
  %s2 = inlined_call_operand.vmem [shape: f32[2,16,1], index: 2, kind: input, shape index: {}]
  %s3 = inlined_call_operand.hbm [shape: f32[96,128], index: 3, kind: input, shape index: {}]
  %s4 = inlined_call_operand.hbm [shape: f32[2,8,128], index: 4, kind: output, shape index: {}]
  %s5 = sld [smem:[#allocation0]]
  $region53: #{tpu_custom_call.1} parent=0
    _
  %s7 = ssub.s32 1, %s5
  %s8 = scalar_select 0, %s7, %s5
  $region1: #{tpu_custom_call.1} parent=0
    #allocation2 [shape = 'u8[49152]{0}', space=vmem, size = 0xc000, scoped, tag = 'input window, operand 3, single buffered']
    #allocation3 [shape = 's32[2]{0}', space=sflag, size = 0x8, scoped, tag = 'scoped memory for tpu_custom_call.1']
    #allocation4 [shape = 's32[2]{0}', space=sflag, size = 0x8, scoped, tag = 'scoped memory for tpu_custom_call.1']
    #allocation5 [shape = 'u8[8192]{0}', space=vmem, size = 0x2000, scoped, tag = 'output window, operand 0']
    %9 = vsyncpa [#allocation3], 0
    %10 = vsyncpa [#allocation4], 0
    %s11 = scalar_lea.sflag [#allocation4], 1
    %12 = vsyncpa %s11, 0
    loop: start=0, step=1, limit=4
    $region2: #{tpu_custom_call.1} parent=1 // loop_pre_header
      _
    $region3: #{tpu_custom_call.1} parent=1 // loop_header
      %s14 = sphi 0, %s18
      %p15 = scmp.ge.s32.totalorder %s14, 4
      %s24 = sphi 0, %s26
      %s27 = sphi 0, %s24
      %s28 = sphi 0, %s27
      %s44 = sphi 0, %s28
      %s50 = sphi 0, %s52
      %s53 = sphi 0, %s50
      %s54 = sphi 0, %s53
      %s70 = sphi 0, %s54
      %s76 = sphi 0, %s78
      %s79 = sphi 0, %s76
      %s80 = sphi 0, %s79
      %s96 = sphi 0, %s80
      %s100 = sphi 0, %s100
      %s102 = sphi 0, %s100
      %s103 = sphi 0, %s102
      %s117 = sphi 0, %s103
      %s123 = sphi 0, %s125
      %s126 = sphi 0, %s123
      %s127 = sphi 0, %s126
      %s143 = sphi 0, %s127
    $region4: #{tpu_custom_call.1} parent=1 // loop_header_branch
      %17 = sbr.rel (%p15) target = $region8
    $region5: #{tpu_custom_call.1} parent=1 // loop_body
      %s19 = ssub.s32 %s14, 1
      %s20 = ssub.s32 %s14, 2
      %s21 = sadd.s32 %s14, 1
      %s22 = ssub.s32 %s14, %s21
      %p23 = scmp.eq.s32.totalorder %s22, 0
      %s25 = sadd.s32 %s24, 1
      %s26 = scalar_select %p23, %s24, %s25
      %p29 = pneg %p23
      %p30 = scmp.eq.s32.totalorder %s14, 1
      %p31 = por %p29, %p30
      %p32 = scmp.ne.s32.totalorder %s24, %s27
      %p33 = scmp.eq.s32.totalorder %s14, 0
      %p34 = por %p32, %p33
      %p35 = scmp.ne.s32.totalorder %s24, %s27
      %p36 = scmp.eq.s32.totalorder %s19, 1
      %p37 = por %p35, %p36
      %p38 = scmp.ne.s32.totalorder %s27, %s28
      %p39 = scmp.eq.s32.totalorder %s19, 0
      %p40 = por %p38, %p39
      %p41 = scmp.ne.s32.totalorder %s27, %s28
      %p42 = scmp.eq.s32.totalorder %s20, 1
      %p43 = por %p41, %p42
      %p45 = scmp.ne.s32.totalorder %s28, %s44
      %p46 = scmp.eq.s32.totalorder %s20, 0
      %p47 = por %p45, %p46
      %s48 = ssub.s32 %s14, %s21
      %p49 = scmp.eq.s32.totalorder %s48, 0
      %s51 = sadd.s32 %s50, 1
      %s52 = scalar_select %p49, %s50, %s51
      %p55 = pneg %p49
      %p56 = scmp.eq.s32.totalorder %s14, 1
      %p57 = por %p55, %p56
      %p58 = scmp.ne.s32.totalorder %s50, %s53
      %p59 = scmp.eq.s32.totalorder %s14, 0
      %p60 = por %p58, %p59
      %p61 = scmp.ne.s32.totalorder %s50, %s53
      %p62 = scmp.eq.s32.totalorder %s19, 1
      %p63 = por %p61, %p62
      %p64 = scmp.ne.s32.totalorder %s53, %s54
      %p65 = scmp.eq.s32.totalorder %s19, 0
      %p66 = por %p64, %p65
      %p67 = scmp.ne.s32.totalorder %s53, %s54
      %p68 = scmp.eq.s32.totalorder %s20, 1
      %p69 = por %p67, %p68
      %p71 = scmp.ne.s32.totalorder %s54, %s70
      %p72 = scmp.eq.s32.totalorder %s20, 0
      %p73 = por %p71, %p72
      %s74 = ssub.s32 %s14, %s21
      %p75 = scmp.eq.s32.totalorder %s74, 0
      %s77 = sadd.s32 %s76, 1
      %s78 = scalar_select %p75, %s76, %s77
      %p81 = pneg %p75
      %p82 = scmp.eq.s32.totalorder %s14, 1
      %p83 = por %p81, %p82
      %p84 = scmp.ne.s32.totalorder %s76, %s79
      %p85 = scmp.eq.s32.totalorder %s14, 0
      %p86 = por %p84, %p85
      %p87 = scmp.ne.s32.totalorder %s76, %s79
      %p88 = scmp.eq.s32.totalorder %s19, 1
      %p89 = por %p87, %p88
      %p90 = scmp.ne.s32.totalorder %s79, %s80
      %p91 = scmp.eq.s32.totalorder %s19, 0
      %p92 = por %p90, %p91
      %p93 = scmp.ne.s32.totalorder %s79, %s80
      %p94 = scmp.eq.s32.totalorder %s20, 1
      %p95 = por %p93, %p94
      %p97 = scmp.ne.s32.totalorder %s80, %s96
      %p98 = scmp.eq.s32.totalorder %s20, 0
      %p99 = por %p97, %p98
      %s101 = sadd.s32 %s100, 1
      %p104 = scmp.eq.s32.totalorder %s14, 1
      %p105 = scmp.ne.s32.totalorder %s100, %s102
      %p106 = scmp.eq.s32.totalorder %s14, 0
      %p107 = por %p105, %p106
      %p108 = scmp.ne.s32.totalorder %s100, %s102
      %p109 = scmp.eq.s32.totalorder %s19, 1
      %p110 = por %p108, %p109
      %p111 = scmp.ne.s32.totalorder %s102, %s103
      %p112 = scmp.eq.s32.totalorder %s19, 0
      %p113 = por %p111, %p112
      %p114 = scmp.ne.s32.totalorder %s102, %s103
      %p115 = scmp.eq.s32.totalorder %s20, 1
      %p116 = por %p114, %p115
      %p118 = scmp.ne.s32.totalorder %s103, %s117
      %p119 = scmp.eq.s32.totalorder %s20, 0
      %p120 = por %p118, %p119
      %s121 = ssub.s32 %s14, %s21
      %p122 = scmp.eq.s32.totalorder %s121, 0
      %s124 = sadd.s32 %s123, 1
      %s125 = scalar_select %p122, %s123, %s124
      %p128 = pneg %p122
      %p129 = scmp.eq.s32.totalorder %s14, 1
      %p130 = por %p128, %p129
      %p131 = scmp.ne.s32.totalorder %s123, %s126
      %p132 = scmp.eq.s32.totalorder %s14, 0
      %p133 = por %p131, %p132
      %p134 = scmp.ne.s32.totalorder %s123, %s126
      %p135 = scmp.eq.s32.totalorder %s19, 1
      %p136 = por %p134, %p135
      %p137 = scmp.ne.s32.totalorder %s126, %s127
      %p138 = scmp.eq.s32.totalorder %s19, 0
      %p139 = por %p137, %p138
      %p140 = scmp.ne.s32.totalorder %s126, %s127
      %p141 = scmp.eq.s32.totalorder %s20, 1
      %p142 = por %p140, %p141
      %p144 = scmp.ne.s32.totalorder %s127, %s143
      %p145 = scmp.eq.s32.totalorder %s20, 0
      %p146 = por %p144, %p145
      %p147 = scmp.le.s32.totalorder 1, %s14
      %p148 = scmp.lt.s32.totalorder %s14, 3
      %p149 = pnand %p147, %p148
      %p150 = pneg %p149
      // Predicated region
      $region9: #{tpu_custom_call.1} parent=5 // pred_check
        _
      $region10: #{tpu_custom_call.1} parent=5 // pred_check_branch
        %152 = sbr.rel (%p149) target = $region12
      $region11: #{tpu_custom_call.1} parent=5 // pred_region
        %s153 = ssub.s32 %s14, 1
        // Predicated region
        $region13: #{tpu_custom_call.1} parent=11 // pred_check
          %p154 = pneg %p113
        $region14: #{tpu_custom_call.1} parent=11 // pred_check_branch
          %156 = sbr.rel (%p154) target = $region16
        $region15: #{tpu_custom_call.1} parent=11 // pred_region
          %s158 = ssub.s32 1536, 1536
          %159 = vsyncadd [#allocation3], %s158
          %s160 = sshll.u32 [#allocation2], 4
          %s161 = int_to_ptr.vmem [resolvable:$true] %s160
          %166 = dma.hbm_to_vmem [thread:$0]  %s3, 1536, %s161, [#allocation3], 128, 128, 8
        $region16: #{tpu_custom_call.1} parent=11 // pred_fallthru
          _
      $region12: #{tpu_custom_call.1} parent=5 // pred_fallthru
        _
      %p167 = scmp.lt.s32.totalorder %s14, 2
      // Predicated region
      $region17: #{tpu_custom_call.1} parent=5 // pred_check
        %p168 = pneg %p167
      $region18: #{tpu_custom_call.1} parent=5 // pred_check_branch
        %170 = sbr.rel (%p168) target = $region20
      $region19: #{tpu_custom_call.1} parent=5 // pred_region
        // Predicated region
        $region21: #{tpu_custom_call.1} parent=19 // pred_check
          %p171 = pneg %p34
        $region22: #{tpu_custom_call.1} parent=19 // pred_check_branch
          %173 = sbr.rel (%p171) target = $region24
        $region23: #{tpu_custom_call.1} parent=19 // pred_region
          %p174 = scmp.lt.s32.totalorder %s14, 1
          %s175 = scalar_select %p174, %s14, 1
          %s176 = smul.addr %s175, 2
          %s177 = smul.addr %s176, 4
          %s178 = scalar_lea.vmem %s0, %s177
        $region24: #{tpu_custom_call.1} parent=19 // pred_fallthru
          _
        // Predicated region
        $region25: #{tpu_custom_call.1} parent=19 // pred_check
          %p179 = pneg %p60
        $region26: #{tpu_custom_call.1} parent=19 // pred_check_branch
          %181 = sbr.rel (%p179) target = $region28
        $region27: #{tpu_custom_call.1} parent=19 // pred_region
          %p182 = scmp.lt.s32.totalorder %s14, 1
          %s183 = scalar_select %p182, %s14, 1
          %s184 = smul.addr %s183, 4
          %s185 = scalar_lea.vmem %s1, %s184
        $region28: #{tpu_custom_call.1} parent=19 // pred_fallthru
          _
        // Predicated region
        $region29: #{tpu_custom_call.1} parent=19 // pred_check
          %p186 = pneg %p86
        $region30: #{tpu_custom_call.1} parent=19 // pred_check_branch
          %188 = sbr.rel (%p186) target = $region32
        $region31: #{tpu_custom_call.1} parent=19 // pred_region
          %p189 = scmp.lt.s32.totalorder %s14, 1
          %s190 = scalar_select %p189, %s14, 1
          %s191 = smul.addr %s190, 2
          %s192 = smul.addr %s191, 8
          %s193 = scalar_lea.vmem %s2, %s192
        $region32: #{tpu_custom_call.1} parent=19 // pred_fallthru
          _
      $region20: #{tpu_custom_call.1} parent=5 // pred_fallthru
        _
      %p194 = scmp.le.s32.totalorder 1, %s14
      %p195 = scmp.lt.s32.totalorder %s14, 3
      %p196 = pnand %p194, %p195
      %p197 = pneg %p196
      // Predicated region
      $region33: #{tpu_custom_call.1} parent=5 // pred_check
        _
      $region34: #{tpu_custom_call.1} parent=5 // pred_check_branch
        %199 = sbr.rel (%p196) target = $region36
      $region35: #{tpu_custom_call.1} parent=5 // pred_region
        %s200 = ssub.s32 %s14, 1
        // Predicated region
        $region37: #{tpu_custom_call.1} parent=35 // pred_check
          %p201 = pneg %p113
        $region38: #{tpu_custom_call.1} parent=35 // pred_check_branch
          %203 = sbr.rel (%p201) target = $region40
        $region39: #{tpu_custom_call.1} parent=35 // pred_region
          %204 = dma.done [#allocation3], 1536
        $region40: #{tpu_custom_call.1} parent=35 // pred_fallthru
          _
        %p205 = scmp.lt.s32.totalorder %s19, 1
        %s206 = scalar_select %p205, %s19, 1
        %s207 = smul.addr %s206, 2
        %s208 = smul.addr %s207, 4
        %s209 = scalar_lea.vmem %s0, %s208
        %p210 = pneg %p40
        %p211 = pneg %p37
        %p212 = scmp.lt.s32.totalorder %s19, 1
        %s213 = scalar_select %p212, %s19, 1
        %s214 = smul.addr %s213, 4
        %s215 = scalar_lea.vmem %s1, %s214
        %p216 = pneg %p66
        %p217 = pneg %p63
        %p218 = scmp.lt.s32.totalorder %s19, 1
        %s219 = scalar_select %p218, %s19, 1
        %s220 = smul.addr %s219, 2
        %s221 = smul.addr %s220, 8
        %s222 = scalar_lea.vmem %s2, %s221
        %p223 = pneg %p92
        %p224 = pneg %p89
        %p225 = pneg %p113
        %p226 = pneg %p110
        %p227 = pneg %p139
        %p228 = pneg %p136
        %s229 = sand.u32 %s126, 1
        %s230 = scalar_lea.sflag [#allocation4], %s229
        %s231 = sand.u32 %s126, 1
        %s232 = smul.addr %s231, 8
        %s233 = scalar_lea.vmem [#allocation5], %s232
        %p234 = scmp.lt.s32.totalorder %s19, 1
        %s235 = scalar_select %p234, %s19, 1
        %s236 = smul.addr %s235, 2
        %s237 = smul.addr %s236, 4
        %s238 = scalar_lea.vmem %s0, %s237
        %p239 = scmp.lt.s32.totalorder %s19, 1
        %s240 = scalar_select %p239, %s19, 1
        %s241 = smul.addr %s240, 4
        %s242 = scalar_lea.vmem %s1, %s241
        %p243 = scmp.lt.s32.totalorder %s19, 1
        %s244 = scalar_select %p243, %s19, 1
        %s245 = smul.addr %s244, 2
        %s246 = smul.addr %s245, 8
        %s247 = scalar_lea.vmem %s2, %s246
        %v249 = vld [vmem:[#allocation2] sm:$0x1]
        %v250 = vld [vmem:[#allocation2 + $0x8] sm:$0x1]
        %v251 = vld [vmem:[#allocation2 + $0x10] sm:$0xff]
        %v252 = vld [vmem:[#allocation2 + $0x18] sm:$0xff]
        %v253 = vld [vmem:[#allocation2 + $0x20] sm:$0xff]
        %v254 = vld [vmem:[#allocation2 + $0x28] sm:$0xff]
        %v255 = vpack.c.bf16 %v252, %v251
        %v256 = vpack.c.bf16 %v254, %v253
        %v257 = vld [vmem:[#allocation2 + $0x30] sm:$0x1]
        %v258 = vld [vmem:[#allocation2 + $0x38] sm:$0xff]
        %v259 = vld [vmem:[#allocation2 + $0x40] sm:$0xff]
        %v260 = vld [vmem:[#allocation2 + $0x48] sm:$0xff]
        %v261 = vld [vmem:[#allocation2 + $0x50] sm:$0xff]
        %v262 = vpack.c.bf16 %v259, %v258
        %v263 = vpack.c.bf16 %v261, %v260
        %v264 = vld [vmem:[#allocation2 + $0x58] sm:$0x1]
        %v265 = vld [vmem:[%s238] sm:$0xf]
        %v266 = vld [vmem:[%s238 + $0x4] sm:$0xf]
        %v267 = vld [vmem:[%s247] sm:$0xff]
        %v268 = vld [vmem:[%s247 + $0x8] sm:$0xff]
        %270 = vset.pattern.permute.xlu0 0
        %271 = vperm.xlu0 %270, %v267
        %v272 = vpop.permute.xlu0 %271
        %275 = vset.pattern.permute.xlu0 0
        %276 = vperm.xlu0 %275, %v268
        %v277 = vpop.permute.xlu0 %276
        %v279 = vlaneseq
        %v280 = vshrl.u32 %v279, 7
        %v281 = vsub.s32 0, %v280
        %v282 = vrot.slane %v249, %v281
        %v283 = vmul.f32 %v272, %v282
        %v284 = vmul.f32 %v277, %v282
        %v285 = vpack.c.bf16 %v284, %v283
        %v286 = vlaneseq
        %v287 = vshrl.u32 %v286, 7
        %v288 = vsub.s32 0, %v287
        %v289 = vrot.slane %v250, %v288
        %v292 = vunpack.c.l.b16 %v265
        %v293 = vunpack.c.l.b16 %v266
        %v294 = vpack.c.b16 %v293, %v292
        %vm295 = vcmask 130048
        %v297 = vsel %vm295, %v294, 0
        %299 = vmatprep.subr.bf16.mxu0 0
        %300 = vmatpush1.bf16.msra.mxu0 %v285
        %301 = vmatprep.subr.bf16.mxu0 0
        %302 = vmatpush1.bf16.msra.mxu0 0
        %303 = vmatprep.subr.bf16.mxu0 0
        %304 = vmatpush1.bf16.msra.mxu0 0
        %305 = vmatprep.subr.bf16.mxu0 0
        %306 = vmatpush1.bf16.msra.mxu0 0
        %307 = vmatprep.subr.bf16.mxu0 0
        %308 = vmatpush1.bf16.msra.mxu0 0
        %309 = vmatprep.subr.bf16.mxu0 0
        %310 = vmatpush1.bf16.msra.mxu0 0
        %311 = vmatprep.subr.bf16.mxu0 0
        %312 = vmatpush1.bf16.msra.mxu0 0
        %313 = vmatprep.subr.bf16.mxu0 0
        %314 = vmatpush1.bf16.msra.mxu0 0
        %315 = vmatprep.subr.bf16.mxu0 0
        %316 = vmatpush1.bf16.msra.mxu0 0
        %317 = vmatprep.subr.bf16.mxu0 0
        %318 = vmatpush1.bf16.msra.mxu0 0
        %319 = vmatprep.subr.bf16.mxu0 0
        %320 = vmatpush1.bf16.msra.mxu0 0
        %321 = vmatprep.subr.bf16.mxu0 0
        %322 = vmatpush1.bf16.msra.mxu0 0
        %323 = vmatprep.subr.bf16.mxu0 0
        %324 = vmatpush1.bf16.msra.mxu0 0
        %325 = vmatprep.subr.bf16.mxu0 0
        %326 = vmatpush1.bf16.msra.mxu0 0
        %327 = vmatprep.subr.bf16.mxu0 0
        %328 = vmatpush1.bf16.msra.mxu0 0
        %329 = vmatprep.subr.bf16.mxu0 0
        %330 = vmatpush1.bf16.msra.mxu0 0
        %331 = vmatprep.mubr.bf16.mxu0 0
        %332 = vmatmul.mubr.bf16.gmra.mrb[0].mxu0 %v297
        %v333 = vpop.f32.mrb[0].mxu0
        %v334 = vadd.f32 %v289, %v333
        %v335 = vpop.f32.mrb[0].mxu0
        %v336 = vpop.f32.mrb[0].mxu0
        %v337 = vadd.f32 %v289, %v336
        %v338 = vpop.f32.mrb[0].mxu0
        %339 = vdwg.mxu0
        %v340 = vmax.f32 %v334, 0.0
        %v341 = vmax.f32 %v337, 0.0
        %v342 = vpack.c.bf16 %v341, %v340
        %343 = vmatprep.subr.bf16.mxu0 0
        %344 = vmatpush1.bf16.msra.mxu0 %v342
        %345 = vmatprep.subr.bf16.mxu0 0
        %346 = vmatpush1.bf16.msra.mxu0 0
        %347 = vmatprep.subr.bf16.mxu0 0
        %348 = vmatpush1.bf16.msra.mxu0 0
        %349 = vmatprep.subr.bf16.mxu0 0
        %350 = vmatpush1.bf16.msra.mxu0 0
        %351 = vmatprep.subr.bf16.mxu0 0
        %352 = vmatpush1.bf16.msra.mxu0 0
        %353 = vmatprep.subr.bf16.mxu0 0
        %354 = vmatpush1.bf16.msra.mxu0 0
        %355 = vmatprep.subr.bf16.mxu0 0
        %356 = vmatpush1.bf16.msra.mxu0 0
        %357 = vmatprep.subr.bf16.mxu0 0
        %358 = vmatpush1.bf16.msra.mxu0 0
        %359 = vmatprep.subr.bf16.mxu0 0
        %360 = vmatpush1.bf16.msra.mxu0 0
        %361 = vmatprep.subr.bf16.mxu0 0
        %362 = vmatpush1.bf16.msra.mxu0 0
        %363 = vmatprep.subr.bf16.mxu0 0
        %364 = vmatpush1.bf16.msra.mxu0 0
        %365 = vmatprep.subr.bf16.mxu0 0
        %366 = vmatpush1.bf16.msra.mxu0 0
        %367 = vmatprep.subr.bf16.mxu0 0
        %368 = vmatpush1.bf16.msra.mxu0 0
        %369 = vmatprep.subr.bf16.mxu0 0
        %370 = vmatpush1.bf16.msra.mxu0 0
        %371 = vmatprep.subr.bf16.mxu0 0
        %372 = vmatpush1.bf16.msra.mxu0 0
        %373 = vmatprep.subr.bf16.mxu0 0
        %374 = vmatpush1.bf16.msra.mxu0 0
        %375 = vmatprep.mubr.bf16.mxu0 0
        %376 = vmatmul.mubr.bf16.gmra.mrb[0].mxu0 %v297
        %v377 = vpop.f32.mrb[0].mxu0
        %v378 = vadd.f32 0.0, %v377
        %v379 = vpop.f32.mrb[0].mxu0
        %v380 = vpop.f32.mrb[0].mxu0
        %v381 = vadd.f32 0.0, %v380
        %v382 = vpop.f32.mrb[0].mxu0
        %383 = vdwg.mxu0
        %v384 = vpack.c.bf16 %v381, %v378
        %v385 = vlaneseq
        %v386 = vshrl.u32 %v385, 7
        %v387 = vsub.s32 0, %v386
        %v388 = vrot.slane %v257, %v387
        %vm389 = vcmask 261120
        %v391 = vsel %vm389, %v384, 0
        %393 = vmatprep.subr.bf16.mxu0 0
        %394 = vmatpush1.bf16.msra.mxu0 %v255
        %395 = vmatprep.subr.bf16.mxu0 0
        %396 = vmatpush1.bf16.msra.mxu0 %v256
        %397 = vmatprep.subr.bf16.mxu0 0
        %398 = vmatpush1.bf16.msra.mxu0 0
        %399 = vmatprep.subr.bf16.mxu0 0
        %400 = vmatpush1.bf16.msra.mxu0 0
        %401 = vmatprep.subr.bf16.mxu0 0
        %402 = vmatpush1.bf16.msra.mxu0 0
        %403 = vmatprep.subr.bf16.mxu0 0
        %404 = vmatpush1.bf16.msra.mxu0 0
        %405 = vmatprep.subr.bf16.mxu0 0
        %406 = vmatpush1.bf16.msra.mxu0 0
        %407 = vmatprep.subr.bf16.mxu0 0
        %408 = vmatpush1.bf16.msra.mxu0 0
        %409 = vmatprep.subr.bf16.mxu0 0
        %410 = vmatpush1.bf16.msra.mxu0 0
        %411 = vmatprep.subr.bf16.mxu0 0
        %412 = vmatpush1.bf16.msra.mxu0 0
        %413 = vmatprep.subr.bf16.mxu0 0
        %414 = vmatpush1.bf16.msra.mxu0 0
        %415 = vmatprep.subr.bf16.mxu0 0
        %416 = vmatpush1.bf16.msra.mxu0 0
        %417 = vmatprep.subr.bf16.mxu0 0
        %418 = vmatpush1.bf16.msra.mxu0 0
        %419 = vmatprep.subr.bf16.mxu0 0
        %420 = vmatpush1.bf16.msra.mxu0 0
        %421 = vmatprep.subr.bf16.mxu0 0
        %422 = vmatpush1.bf16.msra.mxu0 0
        %423 = vmatprep.subr.bf16.mxu0 0
        %424 = vmatpush1.bf16.msra.mxu0 0
        %425 = vmatprep.mubr.bf16.mxu0 0
        %426 = vmatmul.mubr.bf16.gmra.mrb[0].mxu0 %v391
        %v427 = vpop.f32.mrb[0].mxu0
        %v428 = vadd.f32 %v388, %v427
        %v429 = vpop.f32.mrb[0].mxu0
        %v430 = vpop.f32.mrb[0].mxu0
        %v431 = vadd.f32 %v388, %v430
        %v432 = vpop.f32.mrb[0].mxu0
        %433 = vdwg.mxu0
        %v434 = vmax.f32 %v428, 0.0
        %v435 = vmax.f32 %v431, 0.0
        %v436 = vld [vmem:[%s242] sm:$0xf]
        %v437 = vpack.c.bf16 %v435, %v434
        %v439 = vsel %vm295, %v436, 0
        %441 = vmatprep.subr.bf16.mxu0 0
        %442 = vmatpush1.bf16.msra.mxu0 %v437
        %443 = vmatprep.subr.bf16.mxu0 0
        %444 = vmatpush1.bf16.msra.mxu0 0
        %445 = vmatprep.subr.bf16.mxu0 0
        %446 = vmatpush1.bf16.msra.mxu0 0
        %447 = vmatprep.subr.bf16.mxu0 0
        %448 = vmatpush1.bf16.msra.mxu0 0
        %449 = vmatprep.subr.bf16.mxu0 0
        %450 = vmatpush1.bf16.msra.mxu0 0
        %451 = vmatprep.subr.bf16.mxu0 0
        %452 = vmatpush1.bf16.msra.mxu0 0
        %453 = vmatprep.subr.bf16.mxu0 0
        %454 = vmatpush1.bf16.msra.mxu0 0
        %455 = vmatprep.subr.bf16.mxu0 0
        %456 = vmatpush1.bf16.msra.mxu0 0
        %457 = vmatprep.subr.bf16.mxu0 0
        %458 = vmatpush1.bf16.msra.mxu0 0
        %459 = vmatprep.subr.bf16.mxu0 0
        %460 = vmatpush1.bf16.msra.mxu0 0
        %461 = vmatprep.subr.bf16.mxu0 0
        %462 = vmatpush1.bf16.msra.mxu0 0
        %463 = vmatprep.subr.bf16.mxu0 0
        %464 = vmatpush1.bf16.msra.mxu0 0
        %465 = vmatprep.subr.bf16.mxu0 0
        %466 = vmatpush1.bf16.msra.mxu0 0
        %467 = vmatprep.subr.bf16.mxu0 0
        %468 = vmatpush1.bf16.msra.mxu0 0
        %469 = vmatprep.subr.bf16.mxu0 0
        %470 = vmatpush1.bf16.msra.mxu0 0
        %471 = vmatprep.subr.bf16.mxu0 0
        %472 = vmatpush1.bf16.msra.mxu0 0
        %473 = vmatprep.mubr.bf16.mxu0 0
        %474 = vmatmul.mubr.bf16.gmra.mrb[0].mxu0 %v439
        %v475 = vpop.f32.mrb[0].mxu0
        %v476 = vadd.f32 0.0, %v475
        %v477 = vpop.f32.mrb[0].mxu0
        %v478 = vpop.f32.mrb[0].mxu0
        %v479 = vpop.f32.mrb[0].mxu0
        %480 = vdwg.mxu0
        %v481 = vpack.c.bf16 %v476, %v476
        %v482 = vlaneseq
        %v483 = vshrl.u32 %v482, 7
        %v484 = vsub.s32 0, %v483
        %v485 = vrot.slane %v264, %v484
        %v487 = vsel %vm389, %v481, 0
        %489 = vmatprep.subr.bf16.mxu0 0
        %490 = vmatpush1.bf16.msra.mxu0 %v262
        %491 = vmatprep.subr.bf16.mxu0 0
        %492 = vmatpush1.bf16.msra.mxu0 %v263
        %493 = vmatprep.subr.bf16.mxu0 0
        %494 = vmatpush1.bf16.msra.mxu0 0
        %495 = vmatprep.subr.bf16.mxu0 0
        %496 = vmatpush1.bf16.msra.mxu0 0
        %497 = vmatprep.subr.bf16.mxu0 0
        %498 = vmatpush1.bf16.msra.mxu0 0
        %499 = vmatprep.subr.bf16.mxu0 0
        %500 = vmatpush1.bf16.msra.mxu0 0
        %501 = vmatprep.subr.bf16.mxu0 0
        %502 = vmatpush1.bf16.msra.mxu0 0
        %503 = vmatprep.subr.bf16.mxu0 0
        %504 = vmatpush1.bf16.msra.mxu0 0
        %505 = vmatprep.subr.bf16.mxu0 0
        %506 = vmatpush1.bf16.msra.mxu0 0
        %507 = vmatprep.subr.bf16.mxu0 0
        %508 = vmatpush1.bf16.msra.mxu0 0
        %509 = vmatprep.subr.bf16.mxu0 0
        %510 = vmatpush1.bf16.msra.mxu0 0
        %511 = vmatprep.subr.bf16.mxu0 0
        %512 = vmatpush1.bf16.msra.mxu0 0
        %513 = vmatprep.subr.bf16.mxu0 0
        %514 = vmatpush1.bf16.msra.mxu0 0
        %515 = vmatprep.subr.bf16.mxu0 0
        %516 = vmatpush1.bf16.msra.mxu0 0
        %517 = vmatprep.subr.bf16.mxu0 0
        %518 = vmatpush1.bf16.msra.mxu0 0
        %519 = vmatprep.subr.bf16.mxu0 0
        %520 = vmatpush1.bf16.msra.mxu0 0
        %521 = vmatprep.mubr.bf16.mxu0 0
        %522 = vmatmul.mubr.bf16.gmra.mrb[0].mxu0 %v487
        %v523 = vpop.f32.mrb[0].mxu0
        %v524 = vadd.f32 %v485, %v523
        %v525 = vpop.f32.mrb[0].mxu0
        %v526 = vpop.f32.mrb[0].mxu0
        %v527 = vpop.f32.mrb[0].mxu0
        %528 = vdwg.mxu0
        %529 = vst [vmem:[%s233] sm:$0xff] %v524
        %s530 = sand.u32 %s126, 1
        %s531 = scalar_lea.sflag [#allocation4], %s530
        %s532 = sand.u32 %s126, 1
        %s533 = smul.addr %s532, 8
        %s534 = scalar_lea.vmem [#allocation5], %s533
        // Predicated region
        $region41: #{tpu_custom_call.1} parent=35 // pred_check
          %p535 = pneg %p136
        $region42: #{tpu_custom_call.1} parent=35 // pred_check_branch
          %537 = sbr.rel (%p535) target = $region44
        $region43: #{tpu_custom_call.1} parent=35 // pred_region
          %s539 = ssub.s32 128, 128
          %540 = vsyncadd %s531, %s539
          %s541 = smul.addr %s19, 128
          %s542 = scalar_lea.hbm %s4, %s541
          %s544 = sshll.u32 %s534, 4
          %s545 = int_to_ptr.vmem [resolvable:$true] %s544
          %547 = dma.vmem_to_hbm [thread:$0]  %s545, 128, %s542, %s531
        $region44: #{tpu_custom_call.1} parent=35 // pred_fallthru
          _
      $region36: #{tpu_custom_call.1} parent=5 // pred_fallthru
        _
      %p548 = scmp.le.s32.totalorder 2, %s14
      // Predicated region
      $region45: #{tpu_custom_call.1} parent=5 // pred_check
        %p549 = pneg %p548
      $region46: #{tpu_custom_call.1} parent=5 // pred_check_branch
        %551 = sbr.rel (%p549) target = $region48
      $region47: #{tpu_custom_call.1} parent=5 // pred_region
        %s552 = ssub.s32 %s14, 2
        // Predicated region
        $region49: #{tpu_custom_call.1} parent=47 // pred_check
          %p553 = pneg %p142
        $region50: #{tpu_custom_call.1} parent=47 // pred_check_branch
          %555 = sbr.rel (%p553) target = $region52
        $region51: #{tpu_custom_call.1} parent=47 // pred_region
          %s556 = sand.u32 %s127, 1
          %s557 = scalar_lea.sflag [#allocation4], %s556
          %s558 = sand.u32 %s127, 1
          %s559 = smul.addr %s558, 8
          %s560 = scalar_lea.vmem [#allocation5], %s559
          %561 = dma.done %s557, 128
        $region52: #{tpu_custom_call.1} parent=47 // pred_fallthru
          _
      $region48: #{tpu_custom_call.1} parent=5 // pred_fallthru
        _
    $region6: #{tpu_custom_call.1} parent=1 // loop_footer
      %s18 = sadd.s32 1, %s14
    $region7: #{tpu_custom_call.1} parent=1 // loop_footer_branch
      %13 = sbr.rel target = $region3
    $region8: #{tpu_custom_call.1} parent=1 // loop_exit
      _
    %562 = vsyncpa [#allocation3], 1
    %s563 = scalar_lea.sflag [#allocation3], 1
    %564 = vsyncpa %s563, 1
    %565 = vsyncpa [#allocation4], 1
    %s566 = scalar_lea.sflag [#allocation4], 1
    %567 = vsyncpa %s566, 1

</llo_original>
